<compile_context>
chip_gen: v7x
topology: tpu7x:2x2x1
jax: 0.10.0
libtpu: 0.0.40
codegen_flags: <defaults>
</compile_context>

<pallas_src>
import jax
import jax.numpy as jnp
from jax.experimental import pallas as pl
from jax.experimental.pallas import tpu as pltpu


# ----------------------------------------------------------------------------
# Faithful translation of cause.forward(): no params, no inputs, no output.
# This is the production path — a pure no-op, zero HBM traffic, zero kernels.
# ----------------------------------------------------------------------------
def cause_forward():
    # TODO(synk): reference forward() is `pass` — nothing to compute in Pallas.
    return None


# ----------------------------------------------------------------------------
# Demo-only Pallas kernel (tiled identity copy) to exercise the TPU path.
# ----------------------------------------------------------------------------
def _copy_kernel(x_ref, o_ref):
    o_ref[...] = x_ref[...]


def _identity_passthrough(x, tile_rows=128, tile_cols=512):
    """Tiled, pipelined copy. Demo plumbing only; not used by cause_forward().

    If a materialized copy were ever genuinely required in production, prefer
    input_output_aliases={0: 0} to avoid allocating/writing a second HBM
    buffer; omitted here so the demo can verify output against the original
    input without worrying about buffer donation.
    """
    rows, cols = x.shape

    # Lane-dense, hardware-aligned tiles: last dim multiple of 128, second-to-
    # last multiple of 8 (or the full extent). Cap the block footprint so the
    # double-buffered pipeline (~4x block bytes across in+out) stays well under
    # v7x's 64 MiB VMEM.
    tr = min(tile_rows, rows)
    tc = min(tile_cols, cols)
    assert rows % tr == 0 and tr % 8 == 0, "demo expects sublane-aligned rows"
    assert cols % tc == 0 and tc % 128 == 0, "demo expects lane-aligned cols"

    grid = (pl.cdiv(rows, tr), pl.cdiv(cols, tc))

    return pl.pallas_call(
        _copy_kernel,
        out_shape=jax.ShapeDtypeStruct((rows, cols), x.dtype),
        grid=grid,
        in_specs=[pl.BlockSpec((tr, tc), lambda i, j: (i, j))],
        out_specs=pl.BlockSpec((tr, tc), lambda i, j: (i, j)),
        compiler_params=pltpu.CompilerParams(
            # Both axes independent -> shard across the 2 TCs on v7x; on
            # v5e/v6e (1 TC) this is a harmless serial loop.
            dimension_semantics=("parallel", "parallel"),
            # Explicit, generation-safe scoped VMEM budget (fits v7x 64 MiB).
            vmem_limit_bytes=32 * 1024 * 1024,
        ),
    )(x)


if __name__ == "__main__":
    # The module's forward takes no inputs and returns None — this is the
    # complete, optimal forward pass.
    result = cause_forward()
    assert result is None, "cause.forward() must return None"

    # Demo: run the tiled identity kernel once on small deterministic data to
    # validate the Pallas/TPU plumbing in this script (not part of forward()).
    key = jax.random.PRNGKey(0)
    x = jax.random.normal(key, (256, 512), dtype=jnp.float32)
    y = _identity_passthrough(x)
    jax.block_until_ready(y)
    assert y.shape == x.shape and y.dtype == x.dtype
    assert jnp.allclose(y, x)

    print("KERNEL_OK")
</pallas_src>

<mosaic_0001>
module attributes {stable_mosaic.version = 11 : i64} {
  func.func @_copy_kernel(%arg0: i32, %arg1: i32, %arg2: memref<128x512xf32, #tpu.memory_space<vmem>>, %arg3: memref<128x512xf32, #tpu.memory_space<vmem>>) attributes {dimension_semantics = [#tpu.dimension_semantics<parallel>, #tpu.dimension_semantics<parallel>], iteration_bounds = array<i64: 2, 1>, scalar_prefetch = 0 : i64, scratch_operands = 0 : i64, tpu.core_type = #tpu.core_type<tc>, window_params = [{transform_indices = @transform_0, window_bounds = array<i64: 128, 512>}, {transform_indices = @transform_1, window_bounds = array<i64: 128, 512>}]} {
    %c0 = arith.constant 0 : index
    %c0_0 = arith.constant 0 : index
    %0 = vector.load %arg2[%c0, %c0_0] : memref<128x512xf32, #tpu.memory_space<vmem>>, vector<128x512xf32>
    %c0_1 = arith.constant 0 : index
    %c0_2 = arith.constant 0 : index
    %1 = vector.load %arg3[%c0_1, %c0_2] : memref<128x512xf32, #tpu.memory_space<vmem>>, vector<128x512xf32>
    tpu.vector_store %arg3[%c0_1, %c0_2], %0 {strides = array<i32>} : memref<128x512xf32, #tpu.memory_space<vmem>>, vector<128x512xf32>,
    return
  }
  func.func @transform_0(%arg0: i32, %arg1: i32) -> (i32, i32) {
    %c0_i32 = arith.constant 0 : i32
    return %arg0, %arg1 : i32, i32
  }
  func.func @transform_1(%arg0: i32, %arg1: i32) -> (i32, i32) {
    %c0_i32 = arith.constant 0 : i32
    return %arg0, %arg1 : i32, i32
  }
}

</mosaic_0001>

<llo_original>
// kernel: tpu_custom_call.1
$region0: #{tpu_custom_call.1}
  #allocation0 [shape = 'u32[]', space=smem, size = 0x4, offset = 0x4, fixed_abs, tag = 'smem constant byte address 0x4 - core index']
  #allocation1 [shape = 'u32[144,128]{1,0:T(1,128)}', space=vmem, size = 0x12000, scoped, tag = 'internal scratch']
  %s0 = inlined_call_operand.hbm [shape: f32[256,512], index: 0, kind: input, shape index: {}]
  %s1 = inlined_call_operand.hbm [shape: f32[256,512], index: 1, kind: output, shape index: {}]
  %s2 = sld [smem:[#allocation0]]
  $region41: #{tpu_custom_call.1} parent=0
    _
  %s4 = ssub.s32 1, %s2
  %s5 = scalar_select 0, %s4, %s2
  $region1: #{tpu_custom_call.1} parent=0
    #allocation2 [shape = 'u8[524288]{0}', space=vmem, size = 0x80000, scoped, tag = 'input window, operand 0']
    #allocation3 [shape = 's32[2]{0}', space=sflag, size = 0x8, scoped, tag = 'scoped memory for tpu_custom_call.1']
    #allocation4 [shape = 's32[2]{0}', space=sflag, size = 0x8, scoped, tag = 'scoped memory for tpu_custom_call.1']
    #allocation5 [shape = 'u8[524288]{0}', space=vmem, size = 0x80000, scoped, tag = 'output window, operand 0']
    %6 = vsyncpa [#allocation3], 0
    %s7 = scalar_lea.sflag [#allocation3], 1
    %8 = vsyncpa %s7, 0
    %9 = vsyncpa [#allocation4], 0
    %s10 = scalar_lea.sflag [#allocation4], 1
    %11 = vsyncpa %s10, 0
    loop: start=0, step=1, limit=4
    $region2: #{tpu_custom_call.1} parent=1 // loop_pre_header
      _
    $region3: #{tpu_custom_call.1} parent=1 // loop_header
      %s13 = sphi 0, %s17
      %p14 = scmp.ge.s32.totalorder %s13, 4
      %s20 = sphi 0, %s32
      %s21 = sphi 0, %s28
      %s22 = sphi 0, %s20
      %s23 = sphi 0, %s21
      %s24 = sphi 0, %s22
      %s25 = sphi 0, %s23
      %s37 = sphi 0, %s39
      %s40 = sphi 0, %s37
      %s41 = sphi 0, %s40
      %s57 = sphi 0, %s41
      %s65 = sphi 0, %s67
      %s68 = sphi 0, %s65
      %s69 = sphi 0, %s68
      %s85 = sphi 0, %s69
    $region4: #{tpu_custom_call.1} parent=1 // loop_header_branch
      %16 = sbr.rel (%p14) target = $region8
    $region5: #{tpu_custom_call.1} parent=1 // loop_body
      %s18 = ssub.s32 %s13, 1
      %s19 = ssub.s32 %s13, 2
      %s26 = sadd.s32 1, %s21
      %p27 = scmp.ge.s32.totalorder %s26, 1
      %s28 = scalar_select %p27, 0, %s26
      %s29 = sadd.s32 1, %s20
      %s30 = scalar_select %p27, %s29, %s20
      %p31 = scmp.ge.s32.totalorder %s30, 2
      %s32 = scalar_select %p31, 0, %s30
      %s33 = ssub.s32 %s20, %s32
      %s34 = ssub.s32 %s21, %s28
      %s35 = sor.u32 %s33, %s34
      %p36 = scmp.eq.s32.totalorder %s35, 0
      %s38 = sadd.s32 %s37, 1
      %s39 = scalar_select %p36, %s37, %s38
      %p42 = pneg %p36
      %p43 = scmp.eq.s32.totalorder %s13, 1
      %p44 = por %p42, %p43
      %p45 = scmp.ne.s32.totalorder %s37, %s40
      %p46 = scmp.eq.s32.totalorder %s13, 0
      %p47 = por %p45, %p46
      %p48 = scmp.ne.s32.totalorder %s37, %s40
      %p49 = scmp.eq.s32.totalorder %s18, 1
      %p50 = por %p48, %p49
      %p51 = scmp.ne.s32.totalorder %s40, %s41
      %p52 = scmp.eq.s32.totalorder %s18, 0
      %p53 = por %p51, %p52
      %p54 = scmp.ne.s32.totalorder %s40, %s41
      %p55 = scmp.eq.s32.totalorder %s19, 1
      %p56 = por %p54, %p55
      %p58 = scmp.ne.s32.totalorder %s41, %s57
      %p59 = scmp.eq.s32.totalorder %s19, 0
      %p60 = por %p58, %p59
      %s61 = ssub.s32 %s20, %s32
      %s62 = ssub.s32 %s21, %s28
      %s63 = sor.u32 %s61, %s62
      %p64 = scmp.eq.s32.totalorder %s63, 0
      %s66 = sadd.s32 %s65, 1
      %s67 = scalar_select %p64, %s65, %s66
      %p70 = pneg %p64
      %p71 = scmp.eq.s32.totalorder %s13, 1
      %p72 = por %p70, %p71
      %p73 = scmp.ne.s32.totalorder %s65, %s68
      %p74 = scmp.eq.s32.totalorder %s13, 0
      %p75 = por %p73, %p74
      %p76 = scmp.ne.s32.totalorder %s65, %s68
      %p77 = scmp.eq.s32.totalorder %s18, 1
      %p78 = por %p76, %p77
      %p79 = scmp.ne.s32.totalorder %s68, %s69
      %p80 = scmp.eq.s32.totalorder %s18, 0
      %p81 = por %p79, %p80
      %p82 = scmp.ne.s32.totalorder %s68, %s69
      %p83 = scmp.eq.s32.totalorder %s19, 1
      %p84 = por %p82, %p83
      %p86 = scmp.ne.s32.totalorder %s69, %s85
      %p87 = scmp.eq.s32.totalorder %s19, 0
      %p88 = por %p86, %p87
      %p89 = scmp.le.s32.totalorder 1, %s13
      %p90 = scmp.lt.s32.totalorder %s13, 3
      %p91 = pnand %p89, %p90
      %p92 = pneg %p91
      // Predicated region
      $region9: #{tpu_custom_call.1} parent=5 // pred_check
        _
      $region10: #{tpu_custom_call.1} parent=5 // pred_check_branch
        %94 = sbr.rel (%p91) target = $region12
      $region11: #{tpu_custom_call.1} parent=5 // pred_region
        %s95 = ssub.s32 %s13, 1
      $region12: #{tpu_custom_call.1} parent=5 // pred_fallthru
        _
      %p96 = scmp.lt.s32.totalorder %s13, 2
      // Predicated region
      $region13: #{tpu_custom_call.1} parent=5 // pred_check
        %p97 = pneg %p96
      $region14: #{tpu_custom_call.1} parent=5 // pred_check_branch
        %99 = sbr.rel (%p97) target = $region16
      $region15: #{tpu_custom_call.1} parent=5 // pred_region
        // Predicated region
        $region17: #{tpu_custom_call.1} parent=15 // pred_check
          %p100 = pneg %p47
        $region18: #{tpu_custom_call.1} parent=15 // pred_check_branch
          %102 = sbr.rel (%p100) target = $region20
        $region19: #{tpu_custom_call.1} parent=15 // pred_region
          %s103 = sand.u32 %s37, 1
          %s104 = scalar_lea.sflag [#allocation3], %s103
          %s105 = sand.u32 %s37, 1
          %s106 = smul.addr %s105, 512
          %s107 = scalar_lea.vmem [#allocation2], %s106
          %s108 = smul.u32 16, %s20
          %s109 = smul.u32 4, %s21
          %s111 = ssub.s32 8192, 8192
          %112 = vsyncadd %s104, %s111
          %s113 = smul.addr %s108, 4
          %s114 = sadd.s32 %s109, %s113
          %s115 = smul.addr %s114, 128
          %s116 = scalar_lea.hbm %s0, %s115
          %s117 = sshll.u32 %s107, 4
          %s118 = int_to_ptr.vmem [resolvable:$true] %s117
          %123 = dma.hbm_to_vmem [thread:$0]  %s116, 8192, %s118, %s104, 512, 512, 32
        $region20: #{tpu_custom_call.1} parent=15 // pred_fallthru
          _
      $region16: #{tpu_custom_call.1} parent=5 // pred_fallthru
        _
      %p124 = scmp.le.s32.totalorder 1, %s13
      %p125 = scmp.lt.s32.totalorder %s13, 3
      %p126 = pnand %p124, %p125
      %p127 = pneg %p126
      // Predicated region
      $region21: #{tpu_custom_call.1} parent=5 // pred_check
        _
      $region22: #{tpu_custom_call.1} parent=5 // pred_check_branch
        %129 = sbr.rel (%p126) target = $region24
      $region23: #{tpu_custom_call.1} parent=5 // pred_region
        %s130 = ssub.s32 %s13, 1
        %s131 = sand.u32 %s40, 1
        %s132 = scalar_lea.sflag [#allocation3], %s131
        %s133 = sand.u32 %s40, 1
        %s134 = smul.addr %s133, 512
        %s135 = scalar_lea.vmem [#allocation2], %s134
        // Predicated region
        $region25: #{tpu_custom_call.1} parent=23 // pred_check
          %p136 = pneg %p53
        $region26: #{tpu_custom_call.1} parent=23 // pred_check_branch
          %138 = sbr.rel (%p136) target = $region28
        $region27: #{tpu_custom_call.1} parent=23 // pred_region
          %139 = dma.done %s132, 8192
        $region28: #{tpu_custom_call.1} parent=23 // pred_fallthru
          _
        %s140 = sand.u32 %s40, 1
        %s141 = scalar_lea.sflag [#allocation3], %s140
        %s142 = sand.u32 %s40, 1
        %s143 = smul.addr %s142, 512
        %s144 = scalar_lea.vmem [#allocation2], %s143
        %p145 = pneg %p53
        %p146 = pneg %p50
        %p147 = pneg %p81
        %p148 = pneg %p78
        %s149 = sand.u32 %s68, 1
        %s150 = scalar_lea.sflag [#allocation4], %s149
        %s151 = sand.u32 %s68, 1
        %s152 = smul.addr %s151, 512
        %s153 = scalar_lea.vmem [#allocation5], %s152
        %s154 = smul.u32 16, %s22
        %s155 = smul.u32 4, %s23
        %s156 = smul.u32 16, %s22
        %s157 = smul.u32 4, %s23
        %v158 = vld [vmem:[%s135] sm:$0xff]
        %v159 = vld [vmem:[%s135 + $0x8] sm:$0xff]
        %v160 = vld [vmem:[%s135 + $0x10] sm:$0xff]
        %v161 = vld [vmem:[%s135 + $0x18] sm:$0xff]
        %v162 = vld [vmem:[%s135 + $0x20] sm:$0xff]
        %v163 = vld [vmem:[%s135 + $0x28] sm:$0xff]
        %v164 = vld [vmem:[%s135 + $0x30] sm:$0xff]
        %v165 = vld [vmem:[%s135 + $0x38] sm:$0xff]
        %v166 = vld [vmem:[%s135 + $0x40] sm:$0xff]
        %v167 = vld [vmem:[%s135 + $0x48] sm:$0xff]
        %v168 = vld [vmem:[%s135 + $0x50] sm:$0xff]
        %v169 = vld [vmem:[%s135 + $0x58] sm:$0xff]
        %v170 = vld [vmem:[%s135 + $0x60] sm:$0xff]
        %v171 = vld [vmem:[%s135 + $0x68] sm:$0xff]
        %v172 = vld [vmem:[%s135 + $0x70] sm:$0xff]
        %v173 = vld [vmem:[%s135 + $0x78] sm:$0xff]
        %v174 = vld [vmem:[%s135 + $0x80] sm:$0xff]
        %v175 = vld [vmem:[%s135 + $0x88] sm:$0xff]
        %v176 = vld [vmem:[%s135 + $0x90] sm:$0xff]
        %v177 = vld [vmem:[%s135 + $0x98] sm:$0xff]
        %v178 = vld [vmem:[%s135 + $0xa0] sm:$0xff]
        %v179 = vld [vmem:[%s135 + $0xa8] sm:$0xff]
        %v180 = vld [vmem:[%s135 + $0xb0] sm:$0xff]
        %v181 = vld [vmem:[%s135 + $0xb8] sm:$0xff]
        %v182 = vld [vmem:[%s135 + $0xc0] sm:$0xff]
        %v183 = vld [vmem:[%s135 + $0xc8] sm:$0xff]
        %v184 = vld [vmem:[%s135 + $0xd0] sm:$0xff]
        %v185 = vld [vmem:[%s135 + $0xd8] sm:$0xff]
        %v186 = vld [vmem:[%s135 + $0xe0] sm:$0xff]
        %v187 = vld [vmem:[%s135 + $0xe8] sm:$0xff]
        %v188 = vld [vmem:[%s135 + $0xf0] sm:$0xff]
        %v189 = vld [vmem:[%s135 + $0xf8] sm:$0xff]
        %v190 = vld [vmem:[%s135 + $0x100] sm:$0xff]
        %v191 = vld [vmem:[%s135 + $0x108] sm:$0xff]
        %v192 = vld [vmem:[%s135 + $0x110] sm:$0xff]
        %v193 = vld [vmem:[%s135 + $0x118] sm:$0xff]
        %v194 = vld [vmem:[%s135 + $0x120] sm:$0xff]
        %v195 = vld [vmem:[%s135 + $0x128] sm:$0xff]
        %v196 = vld [vmem:[%s135 + $0x130] sm:$0xff]
        %v197 = vld [vmem:[%s135 + $0x138] sm:$0xff]
        %v198 = vld [vmem:[%s135 + $0x140] sm:$0xff]
        %v199 = vld [vmem:[%s135 + $0x148] sm:$0xff]
        %v200 = vld [vmem:[%s135 + $0x150] sm:$0xff]
        %v201 = vld [vmem:[%s135 + $0x158] sm:$0xff]
        %v202 = vld [vmem:[%s135 + $0x160] sm:$0xff]
        %v203 = vld [vmem:[%s135 + $0x168] sm:$0xff]
        %v204 = vld [vmem:[%s135 + $0x170] sm:$0xff]
        %v205 = vld [vmem:[%s135 + $0x178] sm:$0xff]
        %v206 = vld [vmem:[%s135 + $0x180] sm:$0xff]
        %v207 = vld [vmem:[%s135 + $0x188] sm:$0xff]
        %v208 = vld [vmem:[%s135 + $0x190] sm:$0xff]
        %v209 = vld [vmem:[%s135 + $0x198] sm:$0xff]
        %v210 = vld [vmem:[%s135 + $0x1a0] sm:$0xff]
        %v211 = vld [vmem:[%s135 + $0x1a8] sm:$0xff]
        %v212 = vld [vmem:[%s135 + $0x1b0] sm:$0xff]
        %v213 = vld [vmem:[%s135 + $0x1b8] sm:$0xff]
        %v214 = vld [vmem:[%s135 + $0x1c0] sm:$0xff]
        %v215 = vld [vmem:[%s135 + $0x1c8] sm:$0xff]
        %v216 = vld [vmem:[%s135 + $0x1d0] sm:$0xff]
        %v217 = vld [vmem:[%s135 + $0x1d8] sm:$0xff]
        %v218 = vld [vmem:[%s135 + $0x1e0] sm:$0xff]
        %v219 = vld [vmem:[%s135 + $0x1e8] sm:$0xff]
        %v220 = vld [vmem:[%s135 + $0x1f0] sm:$0xff]
        %v221 = vld [vmem:[%s135 + $0x1f8] sm:$0xff]
        %222 = vst [vmem:[%s153] sm:$0xff] %v158
        %223 = vst [vmem:[%s153 + $0x8] sm:$0xff] %v159
        %224 = vst [vmem:[%s153 + $0x10] sm:$0xff] %v160
        %225 = vst [vmem:[%s153 + $0x18] sm:$0xff] %v161
        %226 = vst [vmem:[%s153 + $0x20] sm:$0xff] %v162
        %227 = vst [vmem:[%s153 + $0x28] sm:$0xff] %v163
        %228 = vst [vmem:[%s153 + $0x30] sm:$0xff] %v164
        %229 = vst [vmem:[%s153 + $0x38] sm:$0xff] %v165
        %230 = vst [vmem:[%s153 + $0x40] sm:$0xff] %v166
        %231 = vst [vmem:[%s153 + $0x48] sm:$0xff] %v167
        %232 = vst [vmem:[%s153 + $0x50] sm:$0xff] %v168
        %233 = vst [vmem:[%s153 + $0x58] sm:$0xff] %v169
        %234 = vst [vmem:[%s153 + $0x60] sm:$0xff] %v170
        %235 = vst [vmem:[%s153 + $0x68] sm:$0xff] %v171
        %236 = vst [vmem:[%s153 + $0x70] sm:$0xff] %v172
        %237 = vst [vmem:[%s153 + $0x78] sm:$0xff] %v173
        %238 = vst [vmem:[%s153 + $0x80] sm:$0xff] %v174
        %239 = vst [vmem:[%s153 + $0x88] sm:$0xff] %v175
        %240 = vst [vmem:[%s153 + $0x90] sm:$0xff] %v176
        %241 = vst [vmem:[%s153 + $0x98] sm:$0xff] %v177
        %242 = vst [vmem:[%s153 + $0xa0] sm:$0xff] %v178
        %243 = vst [vmem:[%s153 + $0xa8] sm:$0xff] %v179
        %244 = vst [vmem:[%s153 + $0xb0] sm:$0xff] %v180
        %245 = vst [vmem:[%s153 + $0xb8] sm:$0xff] %v181
        %246 = vst [vmem:[%s153 + $0xc0] sm:$0xff] %v182
        %247 = vst [vmem:[%s153 + $0xc8] sm:$0xff] %v183
        %248 = vst [vmem:[%s153 + $0xd0] sm:$0xff] %v184
        %249 = vst [vmem:[%s153 + $0xd8] sm:$0xff] %v185
        %250 = vst [vmem:[%s153 + $0xe0] sm:$0xff] %v186
        %251 = vst [vmem:[%s153 + $0xe8] sm:$0xff] %v187
        %252 = vst [vmem:[%s153 + $0xf0] sm:$0xff] %v188
        %253 = vst [vmem:[%s153 + $0xf8] sm:$0xff] %v189
        %254 = vst [vmem:[%s153 + $0x100] sm:$0xff] %v190
        %255 = vst [vmem:[%s153 + $0x108] sm:$0xff] %v191
        %256 = vst [vmem:[%s153 + $0x110] sm:$0xff] %v192
        %257 = vst [vmem:[%s153 + $0x118] sm:$0xff] %v193
        %258 = vst [vmem:[%s153 + $0x120] sm:$0xff] %v194
        %259 = vst [vmem:[%s153 + $0x128] sm:$0xff] %v195
        %260 = vst [vmem:[%s153 + $0x130] sm:$0xff] %v196
        %261 = vst [vmem:[%s153 + $0x138] sm:$0xff] %v197
        %262 = vst [vmem:[%s153 + $0x140] sm:$0xff] %v198
        %263 = vst [vmem:[%s153 + $0x148] sm:$0xff] %v199
        %264 = vst [vmem:[%s153 + $0x150] sm:$0xff] %v200
        %265 = vst [vmem:[%s153 + $0x158] sm:$0xff] %v201
        %266 = vst [vmem:[%s153 + $0x160] sm:$0xff] %v202
        %267 = vst [vmem:[%s153 + $0x168] sm:$0xff] %v203
        %268 = vst [vmem:[%s153 + $0x170] sm:$0xff] %v204
        %269 = vst [vmem:[%s153 + $0x178] sm:$0xff] %v205
        %270 = vst [vmem:[%s153 + $0x180] sm:$0xff] %v206
        %271 = vst [vmem:[%s153 + $0x188] sm:$0xff] %v207
        %272 = vst [vmem:[%s153 + $0x190] sm:$0xff] %v208
        %273 = vst [vmem:[%s153 + $0x198] sm:$0xff] %v209
        %274 = vst [vmem:[%s153 + $0x1a0] sm:$0xff] %v210
        %275 = vst [vmem:[%s153 + $0x1a8] sm:$0xff] %v211
        %276 = vst [vmem:[%s153 + $0x1b0] sm:$0xff] %v212
        %277 = vst [vmem:[%s153 + $0x1b8] sm:$0xff] %v213
        %278 = vst [vmem:[%s153 + $0x1c0] sm:$0xff] %v214
        %279 = vst [vmem:[%s153 + $0x1c8] sm:$0xff] %v215
        %280 = vst [vmem:[%s153 + $0x1d0] sm:$0xff] %v216
        %281 = vst [vmem:[%s153 + $0x1d8] sm:$0xff] %v217
        %282 = vst [vmem:[%s153 + $0x1e0] sm:$0xff] %v218
        %283 = vst [vmem:[%s153 + $0x1e8] sm:$0xff] %v219
        %284 = vst [vmem:[%s153 + $0x1f0] sm:$0xff] %v220
        %285 = vst [vmem:[%s153 + $0x1f8] sm:$0xff] %v221
        %s286 = sand.u32 %s68, 1
        %s287 = scalar_lea.sflag [#allocation4], %s286
        %s288 = sand.u32 %s68, 1
        %s289 = smul.addr %s288, 512
        %s290 = scalar_lea.vmem [#allocation5], %s289
        // Predicated region
        $region29: #{tpu_custom_call.1} parent=23 // pred_check
          %p291 = pneg %p78
        $region30: #{tpu_custom_call.1} parent=23 // pred_check_branch
          %293 = sbr.rel (%p291) target = $region32
        $region31: #{tpu_custom_call.1} parent=23 // pred_region
          %s294 = smul.u32 16, %s22
          %s295 = smul.u32 4, %s23
          %s297 = ssub.s32 8192, 8192
          %298 = vsyncadd %s287, %s297
          %s299 = smul.addr %s294, 4
          %s300 = sadd.s32 %s295, %s299
          %s301 = smul.addr %s300, 128
          %s302 = scalar_lea.hbm %s1, %s301
          %s303 = sshll.u32 %s290, 4
          %s304 = int_to_ptr.vmem [resolvable:$true] %s303
          %309 = dma.vmem_to_hbm [thread:$0]  %s304, 8192, %s302, %s287, 512, 512, 32
        $region32: #{tpu_custom_call.1} parent=23 // pred_fallthru
          _
      $region24: #{tpu_custom_call.1} parent=5 // pred_fallthru
        _
      %p310 = scmp.le.s32.totalorder 2, %s13
      // Predicated region
      $region33: #{tpu_custom_call.1} parent=5 // pred_check
        %p311 = pneg %p310
      $region34: #{tpu_custom_call.1} parent=5 // pred_check_branch
        %313 = sbr.rel (%p311) target = $region36
      $region35: #{tpu_custom_call.1} parent=5 // pred_region
        %s314 = ssub.s32 %s13, 2
        // Predicated region
        $region37: #{tpu_custom_call.1} parent=35 // pred_check
          %p315 = pneg %p84
        $region38: #{tpu_custom_call.1} parent=35 // pred_check_branch
          %317 = sbr.rel (%p315) target = $region40
        $region39: #{tpu_custom_call.1} parent=35 // pred_region
          %s318 = sand.u32 %s69, 1
          %s319 = scalar_lea.sflag [#allocation4], %s318
          %s320 = sand.u32 %s69, 1
          %s321 = smul.addr %s320, 512
          %s322 = scalar_lea.vmem [#allocation5], %s321
          %323 = dma.done %s319, 8192
        $region40: #{tpu_custom_call.1} parent=35 // pred_fallthru
          _
      $region36: #{tpu_custom_call.1} parent=5 // pred_fallthru
        _
    $region6: #{tpu_custom_call.1} parent=1 // loop_footer
      %s17 = sadd.s32 1, %s13
    $region7: #{tpu_custom_call.1} parent=1 // loop_footer_branch
      %12 = sbr.rel target = $region3
    $region8: #{tpu_custom_call.1} parent=1 // loop_exit
      _
    %324 = vsyncpa [#allocation3], 1
    %s325 = scalar_lea.sflag [#allocation3], 1
    %326 = vsyncpa %s325, 1
    %327 = vsyncpa [#allocation4], 1
    %s328 = scalar_lea.sflag [#allocation4], 1
    %329 = vsyncpa %s328, 1

</llo_original>
